<compile_context>
chip_gen: v7x
topology: tpu7x:2x2x1
jax: 0.10.0
libtpu: 0.0.40
codegen_flags: <defaults>
</compile_context>

<pallas_src>
import jax
import jax.numpy as jnp
from jax.experimental import pallas as pl
from jax.experimental.pallas import tpu as pltpu


def _max_add_kernel(a_ref, b_ref, o_ref):
    # Elementwise hot path on the VPU: max(a + a, b + b).
    a = a_ref[...]
    b = b_ref[...]
    o_ref[...] = jnp.maximum(a + a, b + b)


def _min_sublanes(dtype):
    # Per-dtype minimum sublane tile: f32 -> 8, bf16/f16 -> 16, int8/fp8 -> 32.
    return {4: 8, 2: 16, 1: 32}.get(jnp.dtype(dtype).itemsize, 8)


def _pick_slab(n, dtype):
    """Pick a lane-dense 2D slab (rows, cols) for the flattened array.

    Prefers a copy-free reshape (no padding): cols a wide multiple of 128 that
    divides n, with rows a multiple of the dtype's minimum sublane count.
    """
    min_sub = _min_sublanes(dtype)
    for cols in (8192, 4096, 2048, 1024, 512, 256, 128):
        if n % cols == 0 and (n // cols) % min_sub == 0:
            return cols, n // cols, False
    # Ragged size: fall back to a 128-lane slab and pad only the tail.
    cols = 128
    rows = -(-n // cols)
    rows = -(-rows // min_sub) * min_sub
    return cols, rows, True


def _pick_tile_rows(rows, cols, dtype, *, target_tile_bytes=2 * 1024 * 1024, min_grid=4):
    """Row tile: ~target_tile_bytes per block (v7x-safe), an exact divisor of
    rows, a multiple of the dtype's min sublane count, and leaving >= min_grid
    grid steps when the problem is big enough (v7x 2-TC sharding + pipelining)."""
    min_sub = _min_sublanes(dtype)
    itemsize = jnp.dtype(dtype).itemsize
    bytes_per_row = cols * itemsize
    t = max(min_sub, (target_tile_bytes // bytes_per_row) // min_sub * min_sub)
    t = min(t, rows)
    if rows >= min_grid * min_sub:
        t = min(t, max(min_sub, (rows // min_grid) // min_sub * min_sub))
    while rows % t != 0:
        t -= min_sub
    return t


def simple_max(a, b):
    """Pallas TPU implementation of SimpleMaxModule.forward: max(a+a, b+b)."""
    assert a.shape == b.shape and a.dtype == b.dtype
    orig_shape = a.shape
    dtype = a.dtype
    n = a.size

    cols, rows, needs_pad = _pick_slab(n, dtype)
    padded = rows * cols

    a_flat = a.reshape(-1)
    b_flat = b.reshape(-1)
    if needs_pad:
        # Pad only the ragged tail; pad region computes max(0, 0) and is sliced off.
        a_flat = jnp.pad(a_flat, (0, padded - n))
        b_flat = jnp.pad(b_flat, (0, padded - n))
    a2 = a_flat.reshape(rows, cols)   # free reshape on the copy-free path
    b2 = b_flat.reshape(rows, cols)

    tile_rows = _pick_tile_rows(rows, cols, dtype)
    grid = (rows // tile_rows,)
    spec = pl.BlockSpec((tile_rows, cols), lambda i: (i, 0))

    tile_bytes = tile_rows * cols * jnp.dtype(dtype).itemsize
    # ~6x tile bytes live at once (2 inputs + 1 output, double-buffered) plus
    # headroom; keep the scoped limit under v7x's 64 MiB physical VMEM.
    vmem_limit = int(min(48 * 1024 * 1024, max(32 * 1024 * 1024, 8 * tile_bytes)))

    out2 = pl.pallas_call(
        _max_add_kernel,
        out_shape=jax.ShapeDtypeStruct((rows, cols), dtype),
        grid_spec=pltpu.PrefetchScalarGridSpec(
            num_scalar_prefetch=0,
            grid=grid,
            in_specs=[spec, spec],
            out_specs=spec,
        ),
        compiler_params=pltpu.CompilerParams(
            dimension_semantics=("parallel",),
            vmem_limit_bytes=vmem_limit,
        ),
    )(a2, b2)

    out_flat = out2.reshape(-1)
    if needs_pad:
        out_flat = out_flat[:n]
    return out_flat.reshape(orig_shape)


if __name__ == "__main__":
    key = jax.random.PRNGKey(0)
    ka, kb, kc, kd = jax.random.split(key, 4)

    # NCHW-like shape from the test module: 2*4*16*16 = 2048 -> copy-free (8, 256) slab.
    a = jax.random.normal(ka, (2, 4, 16, 16), dtype=jnp.float32)
    b = jax.random.normal(kb, (2, 4, 16, 16), dtype=jnp.float32)
    out = simple_max(a, b)
    jax.block_until_ready(out)
    ref = jnp.maximum(a + a, b + b)
    assert out.shape == ref.shape and out.dtype == ref.dtype
    assert bool(jnp.allclose(out, ref)), "mismatch vs reference (copy-free path)"

    # Ragged shape exercising the tail-pad fallback path.
    a2 = jax.random.normal(kc, (3, 5, 7, 9), dtype=jnp.float32)
    b2 = jax.random.normal(kd, (3, 5, 7, 9), dtype=jnp.float32)
    out2 = simple_max(a2, b2)
    jax.block_until_ready(out2)
    ref2 = jnp.maximum(a2 + a2, b2 + b2)
    assert bool(jnp.allclose(out2, ref2)), "mismatch vs reference (padded path)"

    print("KERNEL_OK")
</pallas_src>

<mosaic_0001>
module attributes {stable_mosaic.version = 11 : i64} {
  func.func @_max_add_kernel(%arg0: i32, %arg1: memref<8x256xf32, #tpu.memory_space<vmem>>, %arg2: memref<8x256xf32, #tpu.memory_space<vmem>>, %arg3: memref<8x256xf32, #tpu.memory_space<vmem>>) attributes {dimension_semantics = [#tpu.dimension_semantics<parallel>], iteration_bounds = array<i64: 1>, scalar_prefetch = 0 : i64, scratch_operands = 0 : i64, tpu.core_type = #tpu.core_type<tc>, window_params = [{transform_indices = @transform_0, window_bounds = array<i64: 8, 256>}, {transform_indices = @transform_1, window_bounds = array<i64: 8, 256>}, {transform_indices = @transform_2, window_bounds = array<i64: 8, 256>}]} {
    %c0 = arith.constant 0 : index
    %c0_0 = arith.constant 0 : index
    %0 = vector.load %arg1[%c0, %c0_0] : memref<8x256xf32, #tpu.memory_space<vmem>>, vector<8x256xf32>
    %c0_1 = arith.constant 0 : index
    %c0_2 = arith.constant 0 : index
    %1 = vector.load %arg2[%c0_1, %c0_2] : memref<8x256xf32, #tpu.memory_space<vmem>>, vector<8x256xf32>
    %2 = arith.addf %0, %0 : vector<8x256xf32>
    %3 = arith.addf %1, %1 : vector<8x256xf32>
    %4 = arith.maximumf %2, %3 : vector<8x256xf32>
    %c0_3 = arith.constant 0 : index
    %c0_4 = arith.constant 0 : index
    %5 = vector.load %arg3[%c0_3, %c0_4] : memref<8x256xf32, #tpu.memory_space<vmem>>, vector<8x256xf32>
    tpu.vector_store %arg3[%c0_3, %c0_4], %4 {strides = array<i32>} : memref<8x256xf32, #tpu.memory_space<vmem>>, vector<8x256xf32>,
    return
  }
  func.func @transform_0(%arg0: i32) -> (i32, i32) {
    %c0_i32 = arith.constant 0 : i32
    %c0_i32_0 = arith.constant 0 : i32
    return %arg0, %c0_i32 : i32, i32
  }
  func.func @transform_1(%arg0: i32) -> (i32, i32) {
    %c0_i32 = arith.constant 0 : i32
    %c0_i32_0 = arith.constant 0 : i32
    return %arg0, %c0_i32 : i32, i32
  }
  func.func @transform_2(%arg0: i32) -> (i32, i32) {
    %c0_i32 = arith.constant 0 : i32
    %c0_i32_0 = arith.constant 0 : i32
    return %arg0, %c0_i32 : i32, i32
  }
}

</mosaic_0001>

<llo_original>
// kernel: tpu_custom_call.1
$region0: #{tpu_custom_call.1}
  #allocation0 [shape = 'u32[]', space=smem, size = 0x4, offset = 0x4, fixed_abs, tag = 'smem constant byte address 0x4 - core index']
  #allocation1 [shape = 'u32[144,128]{1,0:T(1,128)}', space=vmem, size = 0x12000, scoped, tag = 'internal scratch']
  %s0 = inlined_call_operand.hbm [shape: f32[8,256], index: 0, kind: input, shape index: {}]
  %s1 = inlined_call_operand.hbm [shape: f32[8,256], index: 1, kind: input, shape index: {}]
  %s2 = inlined_call_operand.hbm [shape: f32[8,256], index: 2, kind: output, shape index: {}]
  %s3 = sld [smem:[#allocation0]]
  $region26: #{tpu_custom_call.1} parent=0
    _
  %s5 = ssub.s32 1, %s3
  %s6 = scalar_select 0, %s5, %s3
  $region1: #{tpu_custom_call.1} parent=0
    #allocation2 [shape = 'u8[8192]{0}', space=vmem, size = 0x2000, scoped, tag = 'input window, operand 0, single buffered']
    #allocation3 [shape = 's32[1]{0}', space=sflag, size = 0x4, scoped, tag = 'scoped memory for tpu_custom_call.1']
    #allocation4 [shape = 's32[1]{0}', space=sflag, size = 0x4, scoped, tag = 'scoped memory for tpu_custom_call.1']
    #allocation5 [shape = 'u8[8192]{0}', space=vmem, size = 0x2000, scoped, tag = 'input window, operand 1, single buffered']
    #allocation6 [shape = 's32[1]{0}', space=sflag, size = 0x4, scoped, tag = 'scoped memory for tpu_custom_call.1']
    #allocation7 [shape = 'u8[8192]{0}', space=vmem, size = 0x2000, scoped, tag = 'output window, operand 0, single buffered']
    %7 = vsyncpa [#allocation3], 0
    %8 = vsyncpa [#allocation6], 0
    %9 = vsyncpa [#allocation4], 0
    // Predicated region
    $region2: #{tpu_custom_call.1} parent=1 // pred_check
      _
    $region3: #{tpu_custom_call.1} parent=1 // pred_check_branch
      %11 = sbr.rel (0) target = $region5
    $region4: #{tpu_custom_call.1} parent=1 // pred_region
      %s13 = ssub.s32 256, 256
      %14 = vsyncadd [#allocation3], %s13
      %s16 = sshll.u32 [#allocation2], 4
      %s17 = int_to_ptr.vmem [resolvable:$true] %s16
      %19 = dma.hbm_to_vmem [thread:$0]  %s0, 256, %s17, [#allocation3]
    $region5: #{tpu_custom_call.1} parent=1 // pred_fallthru
      _
    // Predicated region
    $region6: #{tpu_custom_call.1} parent=1 // pred_check
      _
    $region7: #{tpu_custom_call.1} parent=1 // pred_check_branch
      %21 = sbr.rel (0) target = $region9
    $region8: #{tpu_custom_call.1} parent=1 // pred_region
      %s23 = ssub.s32 256, 256
      %24 = vsyncadd [#allocation6], %s23
      %s26 = sshll.u32 [#allocation5], 4
      %s27 = int_to_ptr.vmem [resolvable:$true] %s26
      %29 = dma.hbm_to_vmem [thread:$0]  %s1, 256, %s27, [#allocation6]
    $region9: #{tpu_custom_call.1} parent=1 // pred_fallthru
      _
    // Predicated region
    $region10: #{tpu_custom_call.1} parent=1 // pred_check
      _
    $region11: #{tpu_custom_call.1} parent=1 // pred_check_branch
      %31 = sbr.rel (0) target = $region13
    $region12: #{tpu_custom_call.1} parent=1 // pred_region
      %32 = dma.done [#allocation3], 256
    $region13: #{tpu_custom_call.1} parent=1 // pred_fallthru
      _
    // Predicated region
    $region14: #{tpu_custom_call.1} parent=1 // pred_check
      _
    $region15: #{tpu_custom_call.1} parent=1 // pred_check_branch
      %34 = sbr.rel (0) target = $region17
    $region16: #{tpu_custom_call.1} parent=1 // pred_region
      %35 = dma.done [#allocation6], 256
    $region17: #{tpu_custom_call.1} parent=1 // pred_fallthru
      _
    %v36 = vld [vmem:[#allocation2] sm:$0xff]
    %v37 = vld [vmem:[#allocation2 + $0x8] sm:$0xff]
    %v38 = vld [vmem:[#allocation5] sm:$0xff]
    %v39 = vld [vmem:[#allocation5 + $0x8] sm:$0xff]
    %v40 = vadd.f32 %v36, %v36
    %v41 = vadd.f32 %v37, %v37
    %v42 = vadd.f32 %v38, %v38
    %v43 = vadd.f32 %v39, %v39
    %v44 = vmax.f32 %v40, %v42
    %v45 = vmax.f32 %v41, %v43
    %46 = vst [vmem:[#allocation7] sm:$0xff] %v44
    %47 = vst [vmem:[#allocation7 + $0x8] sm:$0xff] %v45
    // Predicated region
    $region18: #{tpu_custom_call.1} parent=1 // pred_check
      _
    $region19: #{tpu_custom_call.1} parent=1 // pred_check_branch
      %49 = sbr.rel (0) target = $region21
    $region20: #{tpu_custom_call.1} parent=1 // pred_region
      %s51 = ssub.s32 256, 256
      %52 = vsyncadd [#allocation4], %s51
      %s54 = sshll.u32 [#allocation7], 4
      %s55 = int_to_ptr.vmem [resolvable:$true] %s54
      %57 = dma.vmem_to_hbm [thread:$0]  %s55, 256, %s2, [#allocation4]
    $region21: #{tpu_custom_call.1} parent=1 // pred_fallthru
      _
    // Predicated region
    $region22: #{tpu_custom_call.1} parent=1 // pred_check
      _
    $region23: #{tpu_custom_call.1} parent=1 // pred_check_branch
      %59 = sbr.rel (0) target = $region25
    $region24: #{tpu_custom_call.1} parent=1 // pred_region
      %60 = dma.done [#allocation4], 256
    $region25: #{tpu_custom_call.1} parent=1 // pred_fallthru
      _
    %61 = vsyncpa [#allocation3], 1
    %62 = vsyncpa [#allocation6], 1
    %63 = vsyncpa [#allocation4], 1

</llo_original>
